<compile_context>
chip_gen: v7x
topology: tpu7x:2x2x1
jax: 0.10.0
libtpu: 0.0.40
codegen_flags: <defaults>
</compile_context>

<pallas_src>
import jax
import jax.numpy as jnp
from jax.experimental import pallas as pl
from jax.experimental.pallas import tpu as pltpu

N_FEATURES = 10
HIDDEN1 = 64
HIDDEN2 = 32
N_CLASSES = 5
OUT_PAD = 128          # lane-dense padded output width (multiple of 128)
DEFAULT_TB = 1024      # batch tile (multiple of 128)


def _round_up(x, m):
    return (x + m - 1) // m * m


def _mlp_kernel(x_ref, w1_ref, b1_ref, w2_ref, b2_ref, w3_ref, b3_ref, o_ref):
    # Whole forward pass fused; per-grid-step operands are a (TB, 10) batch tile
    # plus the (tiny) weights, all resident in VMEM.
    x = x_ref[...]                                                      # (TB, 10)

    h1 = jnp.dot(x, w1_ref[...], preferred_element_type=jnp.float32)   # (TB, 64)
    h1 = jnp.maximum(h1 + b1_ref[...], 0.0)                            # ReLU

    # Dropout(0.2): identity in eval mode.

    h2 = jnp.dot(h1, w2_ref[...], preferred_element_type=jnp.float32)  # (TB, 32)
    h2 = jnp.maximum(h2 + b2_ref[...], 0.0)                            # ReLU

    out = jnp.dot(h2, w3_ref[...], preferred_element_type=jnp.float32)  # (TB, 128)
    o_ref[...] = (out + b3_ref[...]).astype(o_ref.dtype)


def classifier_forward(x, params, *, tb=DEFAULT_TB):
    """x: (B, N_FEATURES) float32. Returns logits of shape (B, N_CLASSES)."""
    w1, b1, w2, b2, w3, b3 = params
    B = x.shape[0]

    # Zero-pad fc3 to a lane-dense 128-wide output slab; slice back afterwards.
    w3p = jnp.zeros((HIDDEN2, OUT_PAD), w3.dtype).at[:, :N_CLASSES].set(w3)
    b3p = jnp.zeros((1, OUT_PAD), b3.dtype).at[:, :N_CLASSES].set(b3)

    # Batch tiling: small batches -> one full block (rounded up to sublane=8);
    # large batches -> grid of `tb`-row tiles (pipelined, parallel across TCs).
    if B <= tb:
        tb_eff = max(_round_up(B, 8), 8)
    else:
        tb_eff = tb
    b_pad = _round_up(B, tb_eff)
    if b_pad != B:
        x = jnp.pad(x, ((0, b_pad - B), (0, 0)))
    n_blocks = b_pad // tb_eff

    # Weights/biases: full-array blocks with constant index_map -> VMEM-resident,
    # not re-DMA'd per grid step.
    const = lambda a: pl.BlockSpec(a.shape, lambda i: (0,) * a.ndim)

    out_padded = pl.pallas_call(
        _mlp_kernel,
        out_shape=jax.ShapeDtypeStruct((b_pad, OUT_PAD), jnp.float32),
        grid=(n_blocks,),
        in_specs=[
            pl.BlockSpec((tb_eff, N_FEATURES), lambda i: (i, 0)),
            const(w1), const(b1), const(w2), const(b2), const(w3p), const(b3p),
        ],
        out_specs=pl.BlockSpec((tb_eff, OUT_PAD), lambda i: (i, 0)),
        compiler_params=pltpu.CompilerParams(
            dimension_semantics=("parallel",)),
    )(x, w1, b1, w2, b2, w3p, b3p)

    return out_padded[:B, :N_CLASSES]


def init_params(key):
    """Deterministic init mimicking PyTorch nn.Linear default U(-1/sqrt(fan_in), +)."""
    def linear_init(k, fan_in, fan_out):
        kw, kb = jax.random.split(k)
        bound = 1.0 / jnp.sqrt(fan_in)
        w = jax.random.uniform(kw, (fan_in, fan_out), jnp.float32, -bound, bound)
        b = jax.random.uniform(kb, (1, fan_out), jnp.float32, -bound, bound)
        return w, b

    k1, k2, k3 = jax.random.split(key, 3)
    w1, b1 = linear_init(k1, N_FEATURES, HIDDEN1)
    w2, b2 = linear_init(k2, HIDDEN1, HIDDEN2)
    w3, b3 = linear_init(k3, HIDDEN2, N_CLASSES)
    return w1, b1, w2, b2, w3, b3


def reference_forward(x, params):
    w1, b1, w2, b2, w3, b3 = params
    h1 = jnp.maximum(x @ w1 + b1, 0.0)
    h2 = jnp.maximum(h1 @ w2 + b2, 0.0)
    return h2 @ w3 + b3


if __name__ == "__main__":
    key = jax.random.PRNGKey(0)
    k_x, k_p, k_x2 = jax.random.split(key, 3)

    params = init_params(k_p)

    # Small demo batch (single-block path).
    B = 8
    x = jax.random.normal(k_x, (B, N_FEATURES), jnp.float32)
    out = jax.block_until_ready(classifier_forward(x, params))
    ref = reference_forward(x, params)
    assert out.shape == (B, N_CLASSES)
    assert jnp.allclose(out, ref, atol=1e-5, rtol=1e-5), "mismatch vs reference (B=8)"

    # Larger ragged batch exercising the batch grid + padding path.
    B2 = 2500
    x2 = jax.random.normal(k_x2, (B2, N_FEATURES), jnp.float32)
    out2 = jax.block_until_ready(classifier_forward(x2, params, tb=1024))
    ref2 = reference_forward(x2, params)
    assert out2.shape == (B2, N_CLASSES)
    assert jnp.allclose(out2, ref2, atol=1e-4, rtol=1e-4), "mismatch vs reference (B=2500)"

    print("KERNEL_OK")
</pallas_src>

<mosaic_0001>
module attributes {stable_mosaic.version = 11 : i64} {
  func.func @_mlp_kernel(%arg0: i32, %arg1: memref<8x10xf32, #tpu.memory_space<vmem>>, %arg2: memref<10x64xf32, #tpu.memory_space<vmem>>, %arg3: memref<1x64xf32, #tpu.memory_space<vmem>>, %arg4: memref<64x32xf32, #tpu.memory_space<vmem>>, %arg5: memref<1x32xf32, #tpu.memory_space<vmem>>, %arg6: memref<32x128xf32, #tpu.memory_space<vmem>>, %arg7: memref<1x128xf32, #tpu.memory_space<vmem>>, %arg8: memref<8x128xf32, #tpu.memory_space<vmem>>) attributes {dimension_semantics = [#tpu.dimension_semantics<parallel>], iteration_bounds = array<i64: 1>, scalar_prefetch = 0 : i64, scratch_operands = 0 : i64, tpu.core_type = #tpu.core_type<tc>, window_params = [{transform_indices = @transform_0, window_bounds = array<i64: 8, 10>}, {pipeline_mode = #tpu.pipeline_mode<synchronous>, transform_indices = @transform_1, window_bounds = array<i64: 10, 64>}, {pipeline_mode = #tpu.pipeline_mode<synchronous>, transform_indices = @transform_2, window_bounds = array<i64: 1, 64>}, {pipeline_mode = #tpu.pipeline_mode<synchronous>, transform_indices = @transform_3, window_bounds = array<i64: 64, 32>}, {pipeline_mode = #tpu.pipeline_mode<synchronous>, transform_indices = @transform_4, window_bounds = array<i64: 1, 32>}, {pipeline_mode = #tpu.pipeline_mode<synchronous>, transform_indices = @transform_5, window_bounds = array<i64: 32, 128>}, {pipeline_mode = #tpu.pipeline_mode<synchronous>, transform_indices = @transform_6, window_bounds = array<i64: 1, 128>}, {transform_indices = @transform_7, window_bounds = array<i64: 8, 128>}]} {
    %c0 = arith.constant 0 : index
    %c0_0 = arith.constant 0 : index
    %0 = vector.load %arg1[%c0, %c0_0] : memref<8x10xf32, #tpu.memory_space<vmem>>, vector<8x10xf32>
    %c0_1 = arith.constant 0 : index
    %c0_2 = arith.constant 0 : index
    %1 = vector.load %arg2[%c0_1, %c0_2] : memref<10x64xf32, #tpu.memory_space<vmem>>, vector<10x64xf32>
    %cst = arith.constant dense<0.000000e+00> : vector<8x64xf32>
    %2 = tpu.matmul %0, %1, %cst {dimension_numbers = #tpu.dot_dimension_numbers<[1], [0], [0], [1], [0, 0, 1, 1], [], []>} : vector<8x10xf32>, vector<10x64xf32>, vector<8x64xf32> -> vector<8x64xf32>
    %c0_3 = arith.constant 0 : index
    %c0_4 = arith.constant 0 : index
    %3 = vector.load %arg3[%c0_3, %c0_4] : memref<1x64xf32, #tpu.memory_space<vmem>>, vector<1x64xf32>
    %4 = vector.broadcast %3 : vector<1x64xf32> to vector<8x64xf32>
    %5 = arith.addf %2, %4 : vector<8x64xf32>
    %cst_5 = arith.constant 0.000000e+00 : f32
    %6 = vector.broadcast %cst_5 : f32 to vector<8x64xf32>
    %7 = arith.maximumf %5, %6 : vector<8x64xf32>
    %c0_6 = arith.constant 0 : index
    %c0_7 = arith.constant 0 : index
    %8 = vector.load %arg4[%c0_6, %c0_7] : memref<64x32xf32, #tpu.memory_space<vmem>>, vector<64x32xf32>
    %cst_8 = arith.constant dense<0.000000e+00> : vector<8x32xf32>
    %9 = tpu.matmul %7, %8, %cst_8 {dimension_numbers = #tpu.dot_dimension_numbers<[1], [0], [0], [1], [0, 0, 1, 1], [], []>} : vector<8x64xf32>, vector<64x32xf32>, vector<8x32xf32> -> vector<8x32xf32>
    %c0_9 = arith.constant 0 : index
    %c0_10 = arith.constant 0 : index
    %10 = vector.load %arg5[%c0_9, %c0_10] : memref<1x32xf32, #tpu.memory_space<vmem>>, vector<1x32xf32>
    %11 = vector.broadcast %10 : vector<1x32xf32> to vector<8x32xf32>
    %12 = arith.addf %9, %11 : vector<8x32xf32>
    %cst_11 = arith.constant 0.000000e+00 : f32
    %13 = vector.broadcast %cst_11 : f32 to vector<8x32xf32>
    %14 = arith.maximumf %12, %13 : vector<8x32xf32>
    %c0_12 = arith.constant 0 : index
    %c0_13 = arith.constant 0 : index
    %15 = vector.load %arg6[%c0_12, %c0_13] : memref<32x128xf32, #tpu.memory_space<vmem>>, vector<32x128xf32>
    %cst_14 = arith.constant dense<0.000000e+00> : vector<8x128xf32>
    %16 = tpu.matmul %14, %15, %cst_14 {dimension_numbers = #tpu.dot_dimension_numbers<[1], [0], [0], [1], [0, 0, 1, 1], [], []>} : vector<8x32xf32>, vector<32x128xf32>, vector<8x128xf32> -> vector<8x128xf32>
    %c0_15 = arith.constant 0 : index
    %c0_16 = arith.constant 0 : index
    %17 = vector.load %arg7[%c0_15, %c0_16] : memref<1x128xf32, #tpu.memory_space<vmem>>, vector<1x128xf32>
    %18 = vector.broadcast %17 : vector<1x128xf32> to vector<8x128xf32>
    %19 = arith.addf %16, %18 : vector<8x128xf32>
    %c0_17 = arith.constant 0 : index
    %c0_18 = arith.constant 0 : index
    %20 = vector.load %arg8[%c0_17, %c0_18] : memref<8x128xf32, #tpu.memory_space<vmem>>, vector<8x128xf32>
    tpu.vector_store %arg8[%c0_17, %c0_18], %19 {strides = array<i32>} : memref<8x128xf32, #tpu.memory_space<vmem>>, vector<8x128xf32>,
    return
  }
  func.func @transform_0(%arg0: i32) -> (i32, i32) {
    %c0_i32 = arith.constant 0 : i32
    %c0_i32_0 = arith.constant 0 : i32
    return %arg0, %c0_i32 : i32, i32
  }
  func.func @transform_1(%arg0: i32) -> (i32, i32) {
    %c0_i32 = arith.constant 0 : i32
    %c0_i32_0 = arith.constant 0 : i32
    %c0_i32_1 = arith.constant 0 : i32
    return %c0_i32, %c0_i32_0 : i32, i32
  }
  func.func @transform_2(%arg0: i32) -> (i32, i32) {
    %c0_i32 = arith.constant 0 : i32
    %c0_i32_0 = arith.constant 0 : i32
    %c0_i32_1 = arith.constant 0 : i32
    return %c0_i32, %c0_i32_0 : i32, i32
  }
  func.func @transform_3(%arg0: i32) -> (i32, i32) {
    %c0_i32 = arith.constant 0 : i32
    %c0_i32_0 = arith.constant 0 : i32
    %c0_i32_1 = arith.constant 0 : i32
    return %c0_i32, %c0_i32_0 : i32, i32
  }
  func.func @transform_4(%arg0: i32) -> (i32, i32) {
    %c0_i32 = arith.constant 0 : i32
    %c0_i32_0 = arith.constant 0 : i32
    %c0_i32_1 = arith.constant 0 : i32
    return %c0_i32, %c0_i32_0 : i32, i32
  }
  func.func @transform_5(%arg0: i32) -> (i32, i32) {
    %c0_i32 = arith.constant 0 : i32
    %c0_i32_0 = arith.constant 0 : i32
    %c0_i32_1 = arith.constant 0 : i32
    return %c0_i32, %c0_i32_0 : i32, i32
  }
  func.func @transform_6(%arg0: i32) -> (i32, i32) {
    %c0_i32 = arith.constant 0 : i32
    %c0_i32_0 = arith.constant 0 : i32
    %c0_i32_1 = arith.constant 0 : i32
    return %c0_i32, %c0_i32_0 : i32, i32
  }
  func.func @transform_7(%arg0: i32) -> (i32, i32) {
    %c0_i32 = arith.constant 0 : i32
    %c0_i32_0 = arith.constant 0 : i32
    return %arg0, %c0_i32 : i32, i32
  }
}

</mosaic_0001>

<llo_original>
// kernel: tpu_custom_call.1
$region0: #{tpu_custom_call.1}
  #allocation0 [shape = 'u32[]', space=smem, size = 0x4, offset = 0x4, fixed_abs, tag = 'smem constant byte address 0x4 - core index']
  #allocation1 [shape = 'u32[144,128]{1,0:T(1,128)}', space=vmem, size = 0x12000, scoped, tag = 'internal scratch']
  %s0 = inlined_call_operand.vmem [shape: f32[8,10], index: 0, kind: input, shape index: {}]
  %s1 = inlined_call_operand.vmem [shape: f32[10,64], index: 1, kind: input, shape index: {}]
  %s2 = inlined_call_operand.vmem [shape: f32[1,64], index: 2, kind: input, shape index: {}]
  %s3 = inlined_call_operand.vmem [shape: f32[64,32], index: 3, kind: input, shape index: {}]
  %s4 = inlined_call_operand.vmem [shape: f32[1,32], index: 4, kind: input, shape index: {}]
  %s5 = inlined_call_operand.vmem [shape: f32[32,128], index: 5, kind: input, shape index: {}]
  %s6 = inlined_call_operand.vmem [shape: f32[1,128], index: 6, kind: input, shape index: {}]
  %s7 = inlined_call_operand.hbm [shape: f32[8,128], index: 7, kind: output, shape index: {}]
  %s8 = sld [smem:[#allocation0]]
  $region38: #{tpu_custom_call.1} parent=0
    _
  %s10 = ssub.s32 1, %s8
  %s11 = scalar_select 0, %s10, %s8
  $region1: #{tpu_custom_call.1} parent=0
    #allocation2 [shape = 'u8[4096]{0}', space=vmem, size = 0x1000, scoped, tag = 'output window, operand 0, single buffered']
    #allocation3 [shape = 's32[1]{0}', space=sflag, size = 0x4, scoped, tag = 'scoped memory for tpu_custom_call.1']
    %12 = vsyncpa [#allocation3], 0
    // Predicated region
    $region2: #{tpu_custom_call.1} parent=1 // pred_check
      _
    $region3: #{tpu_custom_call.1} parent=1 // pred_check_branch
      %14 = sbr.rel (0) target = $region5
    $region4: #{tpu_custom_call.1} parent=1 // pred_region
      _
    $region5: #{tpu_custom_call.1} parent=1 // pred_fallthru
      _
    // Predicated region
    $region6: #{tpu_custom_call.1} parent=1 // pred_check
      _
    $region7: #{tpu_custom_call.1} parent=1 // pred_check_branch
      %16 = sbr.rel (0) target = $region9
    $region8: #{tpu_custom_call.1} parent=1 // pred_region
      _
    $region9: #{tpu_custom_call.1} parent=1 // pred_fallthru
      _
    // Predicated region
    $region10: #{tpu_custom_call.1} parent=1 // pred_check
      _
    $region11: #{tpu_custom_call.1} parent=1 // pred_check_branch
      %18 = sbr.rel (0) target = $region13
    $region12: #{tpu_custom_call.1} parent=1 // pred_region
      _
    $region13: #{tpu_custom_call.1} parent=1 // pred_fallthru
      _
    // Predicated region
    $region14: #{tpu_custom_call.1} parent=1 // pred_check
      _
    $region15: #{tpu_custom_call.1} parent=1 // pred_check_branch
      %20 = sbr.rel (0) target = $region17
    $region16: #{tpu_custom_call.1} parent=1 // pred_region
      _
    $region17: #{tpu_custom_call.1} parent=1 // pred_fallthru
      _
    // Predicated region
    $region18: #{tpu_custom_call.1} parent=1 // pred_check
      _
    $region19: #{tpu_custom_call.1} parent=1 // pred_check_branch
      %22 = sbr.rel (0) target = $region21
    $region20: #{tpu_custom_call.1} parent=1 // pred_region
      _
    $region21: #{tpu_custom_call.1} parent=1 // pred_fallthru
      _
    // Predicated region
    $region22: #{tpu_custom_call.1} parent=1 // pred_check
      _
    $region23: #{tpu_custom_call.1} parent=1 // pred_check_branch
      %24 = sbr.rel (0) target = $region25
    $region24: #{tpu_custom_call.1} parent=1 // pred_region
      _
    $region25: #{tpu_custom_call.1} parent=1 // pred_fallthru
      _
    // Predicated region
    $region26: #{tpu_custom_call.1} parent=1 // pred_check
      _
    $region27: #{tpu_custom_call.1} parent=1 // pred_check_branch
      %26 = sbr.rel (0) target = $region29
    $region28: #{tpu_custom_call.1} parent=1 // pred_region
      _
    $region29: #{tpu_custom_call.1} parent=1 // pred_fallthru
      _
    %v27 = vld [vmem:[%s0] sm:$0xff]
    %v28 = vld [vmem:[%s1] sm:$0xff]
    %v29 = vld [vmem:[%s1 + $0x8] sm:$0x3]
    %v30 = vld [vmem:[%s2] sm:$0x1]
    %v32 = vlaneseq
    %v33 = vshrl.u32 %v32, 7
    %v34 = vsub.s32 0, %v33
    %v35 = vrot.slane %v30, %v34
    %vm37 = vcmask 80896
    %v39 = vsel %vm37, %v27, 0
    %vm41 = vcmask 1041408
    %v43 = vsel %vm41, %v29, 0
    %45 = vmatprep.subr.mxu0 0.0
    %46 = vmatpush1.msra.mxu0 %v28
    %47 = vmatprep.subr.mxu0 0.0
    %48 = vmatpush1.msra.mxu0 %v43
    %49 = vmatprep.subr.mxu0 0.0
    %50 = vmatpush1.msra.mxu0 0.0
    %51 = vmatprep.subr.mxu0 0.0
    %52 = vmatpush1.msra.mxu0 0.0
    %53 = vmatprep.subr.mxu0 0.0
    %54 = vmatpush1.msra.mxu0 0.0
    %55 = vmatprep.subr.mxu0 0.0
    %56 = vmatpush1.msra.mxu0 0.0
    %57 = vmatprep.subr.mxu0 0.0
    %58 = vmatpush1.msra.mxu0 0.0
    %59 = vmatprep.subr.mxu0 0.0
    %60 = vmatpush1.msra.mxu0 0.0
    %61 = vmatprep.subr.mxu0 0.0
    %62 = vmatpush1.msra.mxu0 0.0
    %63 = vmatprep.subr.mxu0 0.0
    %64 = vmatpush1.msra.mxu0 0.0
    %65 = vmatprep.subr.mxu0 0.0
    %66 = vmatpush1.msra.mxu0 0.0
    %67 = vmatprep.subr.mxu0 0.0
    %68 = vmatpush1.msra.mxu0 0.0
    %69 = vmatprep.subr.mxu0 0.0
    %70 = vmatpush1.msra.mxu0 0.0
    %71 = vmatprep.subr.mxu0 0.0
    %72 = vmatpush1.msra.mxu0 0.0
    %73 = vmatprep.subr.mxu0 0.0
    %74 = vmatpush1.msra.mxu0 0.0
    %75 = vmatprep.subr.mxu0 0.0
    %76 = vmatpush1.msra.mxu0 0.0
    %77 = vmatprep.subr.mxu0 0.0
    %78 = vmatpush1.msra.mxu0 0.0
    %79 = vmatprep.subr.mxu0 0.0
    %80 = vmatpush1.msra.mxu0 0.0
    %81 = vmatprep.subr.mxu0 0.0
    %82 = vmatpush1.msra.mxu0 0.0
    %83 = vmatprep.subr.mxu0 0.0
    %84 = vmatpush1.msra.mxu0 0.0
    %85 = vmatprep.subr.mxu0 0.0
    %86 = vmatpush1.msra.mxu0 0.0
    %87 = vmatprep.subr.mxu0 0.0
    %88 = vmatpush1.msra.mxu0 0.0
    %89 = vmatprep.subr.mxu0 0.0
    %90 = vmatpush1.msra.mxu0 0.0
    %91 = vmatprep.subr.mxu0 0.0
    %92 = vmatpush1.msra.mxu0 0.0
    %93 = vmatprep.subr.mxu0 0.0
    %94 = vmatpush1.msra.mxu0 0.0
    %95 = vmatprep.subr.mxu0 0.0
    %96 = vmatpush1.msra.mxu0 0.0
    %97 = vmatprep.subr.mxu0 0.0
    %98 = vmatpush1.msra.mxu0 0.0
    %99 = vmatprep.subr.mxu0 0.0
    %100 = vmatpush1.msra.mxu0 0.0
    %101 = vmatprep.subr.mxu0 0.0
    %102 = vmatpush1.msra.mxu0 0.0
    %103 = vmatprep.subr.mxu0 0.0
    %104 = vmatpush1.msra.mxu0 0.0
    %105 = vmatprep.subr.mxu0 0.0
    %106 = vmatpush1.msra.mxu0 0.0
    %107 = vmatprep.subr.mxu0 0.0
    %108 = vmatpush1.msra.mxu0 0.0
    %109 = vmatprep.mubr.f32.mxu0 0.0
    %110 = vmatmul.mubr.f32.gmra.mrb[0].mxu0 %v39
    %v111 = vpop.f32.mrb[0].mxu0
    %v112 = vadd.f32 %v35, %v111
    %v113 = vpop.f32.mrb[0].mxu0
    %114 = vdwg.mxu0
    %v115 = vmax.f32 %v112, 0.0
    %v116 = vld [vmem:[%s3] sm:$0xff]
    %v117 = vld [vmem:[%s3 + $0x8] sm:$0xff]
    %v118 = vld [vmem:[%s3 + $0x10] sm:$0xff]
    %v119 = vld [vmem:[%s3 + $0x18] sm:$0xff]
    %v120 = vld [vmem:[%s3 + $0x20] sm:$0xff]
    %v121 = vld [vmem:[%s3 + $0x28] sm:$0xff]
    %v122 = vld [vmem:[%s3 + $0x30] sm:$0xff]
    %v123 = vld [vmem:[%s3 + $0x38] sm:$0xff]
    %v124 = vld [vmem:[%s4] sm:$0x1]
    %v126 = vlaneseq
    %v127 = vshrl.u32 %v126, 7
    %v128 = vsub.s32 0, %v127
    %v129 = vrot.slane %v124, %v128
    %vm131 = vcmask 523264
    %v133 = vsel %vm131, %v115, 0
    %135 = vmatprep.subr.mxu0 0.0
    %136 = vmatpush1.msra.mxu0 %v116
    %137 = vmatprep.subr.mxu0 0.0
    %138 = vmatpush1.msra.mxu0 %v117
    %139 = vmatprep.subr.mxu0 0.0
    %140 = vmatpush1.msra.mxu0 %v118
    %141 = vmatprep.subr.mxu0 0.0
    %142 = vmatpush1.msra.mxu0 %v119
    %143 = vmatprep.subr.mxu0 0.0
    %144 = vmatpush1.msra.mxu0 %v120
    %145 = vmatprep.subr.mxu0 0.0
    %146 = vmatpush1.msra.mxu0 %v121
    %147 = vmatprep.subr.mxu0 0.0
    %148 = vmatpush1.msra.mxu0 %v122
    %149 = vmatprep.subr.mxu0 0.0
    %150 = vmatpush1.msra.mxu0 %v123
    %151 = vmatprep.subr.mxu0 0.0
    %152 = vmatpush1.msra.mxu0 0.0
    %153 = vmatprep.subr.mxu0 0.0
    %154 = vmatpush1.msra.mxu0 0.0
    %155 = vmatprep.subr.mxu0 0.0
    %156 = vmatpush1.msra.mxu0 0.0
    %157 = vmatprep.subr.mxu0 0.0
    %158 = vmatpush1.msra.mxu0 0.0
    %159 = vmatprep.subr.mxu0 0.0
    %160 = vmatpush1.msra.mxu0 0.0
    %161 = vmatprep.subr.mxu0 0.0
    %162 = vmatpush1.msra.mxu0 0.0
    %163 = vmatprep.subr.mxu0 0.0
    %164 = vmatpush1.msra.mxu0 0.0
    %165 = vmatprep.subr.mxu0 0.0
    %166 = vmatpush1.msra.mxu0 0.0
    %167 = vmatprep.subr.mxu0 0.0
    %168 = vmatpush1.msra.mxu0 0.0
    %169 = vmatprep.subr.mxu0 0.0
    %170 = vmatpush1.msra.mxu0 0.0
    %171 = vmatprep.subr.mxu0 0.0
    %172 = vmatpush1.msra.mxu0 0.0
    %173 = vmatprep.subr.mxu0 0.0
    %174 = vmatpush1.msra.mxu0 0.0
    %175 = vmatprep.subr.mxu0 0.0
    %176 = vmatpush1.msra.mxu0 0.0
    %177 = vmatprep.subr.mxu0 0.0
    %178 = vmatpush1.msra.mxu0 0.0
    %179 = vmatprep.subr.mxu0 0.0
    %180 = vmatpush1.msra.mxu0 0.0
    %181 = vmatprep.subr.mxu0 0.0
    %182 = vmatpush1.msra.mxu0 0.0
    %183 = vmatprep.subr.mxu0 0.0
    %184 = vmatpush1.msra.mxu0 0.0
    %185 = vmatprep.subr.mxu0 0.0
    %186 = vmatpush1.msra.mxu0 0.0
    %187 = vmatprep.subr.mxu0 0.0
    %188 = vmatpush1.msra.mxu0 0.0
    %189 = vmatprep.subr.mxu0 0.0
    %190 = vmatpush1.msra.mxu0 0.0
    %191 = vmatprep.subr.mxu0 0.0
    %192 = vmatpush1.msra.mxu0 0.0
    %193 = vmatprep.subr.mxu0 0.0
    %194 = vmatpush1.msra.mxu0 0.0
    %195 = vmatprep.subr.mxu0 0.0
    %196 = vmatpush1.msra.mxu0 0.0
    %197 = vmatprep.subr.mxu0 0.0
    %198 = vmatpush1.msra.mxu0 0.0
    %199 = vmatprep.mubr.f32.mxu0 0.0
    %200 = vmatmul.mubr.f32.gmra.mrb[0].mxu0 %v133
    %v201 = vpop.f32.mrb[0].mxu0
    %v202 = vadd.f32 %v129, %v201
    %v203 = vpop.f32.mrb[0].mxu0
    %204 = vdwg.mxu0
    %v205 = vmax.f32 %v202, 0.0
    %v206 = vld [vmem:[%s5] sm:$0xff]
    %v207 = vld [vmem:[%s5 + $0x8] sm:$0xff]
    %v208 = vld [vmem:[%s5 + $0x10] sm:$0xff]
    %v209 = vld [vmem:[%s5 + $0x18] sm:$0xff]
    %v210 = vld [vmem:[%s6] sm:$0x1]
    %v212 = vlaneseq
    %v213 = vshrl.u32 %v212, 7
    %v214 = vsub.s32 0, %v213
    %v215 = vrot.slane %v210, %v214
    %vm217 = vcmask 261120
    %v219 = vsel %vm217, %v205, 0
    %221 = vmatprep.subr.mxu0 0.0
    %222 = vmatpush1.msra.mxu0 %v206
    %223 = vmatprep.subr.mxu0 0.0
    %224 = vmatpush1.msra.mxu0 %v207
    %225 = vmatprep.subr.mxu0 0.0
    %226 = vmatpush1.msra.mxu0 %v208
    %227 = vmatprep.subr.mxu0 0.0
    %228 = vmatpush1.msra.mxu0 %v209
    %229 = vmatprep.subr.mxu0 0.0
    %230 = vmatpush1.msra.mxu0 0.0
    %231 = vmatprep.subr.mxu0 0.0
    %232 = vmatpush1.msra.mxu0 0.0
    %233 = vmatprep.subr.mxu0 0.0
    %234 = vmatpush1.msra.mxu0 0.0
    %235 = vmatprep.subr.mxu0 0.0
    %236 = vmatpush1.msra.mxu0 0.0
    %237 = vmatprep.subr.mxu0 0.0
    %238 = vmatpush1.msra.mxu0 0.0
    %239 = vmatprep.subr.mxu0 0.0
    %240 = vmatpush1.msra.mxu0 0.0
    %241 = vmatprep.subr.mxu0 0.0
    %242 = vmatpush1.msra.mxu0 0.0
    %243 = vmatprep.subr.mxu0 0.0
    %244 = vmatpush1.msra.mxu0 0.0
    %245 = vmatprep.subr.mxu0 0.0
    %246 = vmatpush1.msra.mxu0 0.0
    %247 = vmatprep.subr.mxu0 0.0
    %248 = vmatpush1.msra.mxu0 0.0
    %249 = vmatprep.subr.mxu0 0.0
    %250 = vmatpush1.msra.mxu0 0.0
    %251 = vmatprep.subr.mxu0 0.0
    %252 = vmatpush1.msra.mxu0 0.0
    %253 = vmatprep.subr.mxu0 0.0
    %254 = vmatpush1.msra.mxu0 0.0
    %255 = vmatprep.subr.mxu0 0.0
    %256 = vmatpush1.msra.mxu0 0.0
    %257 = vmatprep.subr.mxu0 0.0
    %258 = vmatpush1.msra.mxu0 0.0
    %259 = vmatprep.subr.mxu0 0.0
    %260 = vmatpush1.msra.mxu0 0.0
    %261 = vmatprep.subr.mxu0 0.0
    %262 = vmatpush1.msra.mxu0 0.0
    %263 = vmatprep.subr.mxu0 0.0
    %264 = vmatpush1.msra.mxu0 0.0
    %265 = vmatprep.subr.mxu0 0.0
    %266 = vmatpush1.msra.mxu0 0.0
    %267 = vmatprep.subr.mxu0 0.0
    %268 = vmatpush1.msra.mxu0 0.0
    %269 = vmatprep.subr.mxu0 0.0
    %270 = vmatpush1.msra.mxu0 0.0
    %271 = vmatprep.subr.mxu0 0.0
    %272 = vmatpush1.msra.mxu0 0.0
    %273 = vmatprep.subr.mxu0 0.0
    %274 = vmatpush1.msra.mxu0 0.0
    %275 = vmatprep.subr.mxu0 0.0
    %276 = vmatpush1.msra.mxu0 0.0
    %277 = vmatprep.subr.mxu0 0.0
    %278 = vmatpush1.msra.mxu0 0.0
    %279 = vmatprep.subr.mxu0 0.0
    %280 = vmatpush1.msra.mxu0 0.0
    %281 = vmatprep.subr.mxu0 0.0
    %282 = vmatpush1.msra.mxu0 0.0
    %283 = vmatprep.subr.mxu0 0.0
    %284 = vmatpush1.msra.mxu0 0.0
    %285 = vmatprep.mubr.f32.mxu0 0.0
    %286 = vmatmul.mubr.f32.gmra.mrb[0].mxu0 %v219
    %v287 = vpop.f32.mrb[0].mxu0
    %v288 = vadd.f32 %v215, %v287
    %v289 = vpop.f32.mrb[0].mxu0
    %290 = vdwg.mxu0
    %291 = vst [vmem:[#allocation2] sm:$0xff] %v288
    // Predicated region
    $region30: #{tpu_custom_call.1} parent=1 // pred_check
      _
    $region31: #{tpu_custom_call.1} parent=1 // pred_check_branch
      %293 = sbr.rel (0) target = $region33
    $region32: #{tpu_custom_call.1} parent=1 // pred_region
      %s295 = ssub.s32 128, 128
      %296 = vsyncadd [#allocation3], %s295
      %s298 = sshll.u32 [#allocation2], 4
      %s299 = int_to_ptr.vmem [resolvable:$true] %s298
      %301 = dma.vmem_to_hbm [thread:$0]  %s299, 128, %s7, [#allocation3]
    $region33: #{tpu_custom_call.1} parent=1 // pred_fallthru
      _
    // Predicated region
    $region34: #{tpu_custom_call.1} parent=1 // pred_check
      _
    $region35: #{tpu_custom_call.1} parent=1 // pred_check_branch
      %303 = sbr.rel (0) target = $region37
    $region36: #{tpu_custom_call.1} parent=1 // pred_region
      %304 = dma.done [#allocation3], 128
    $region37: #{tpu_custom_call.1} parent=1 // pred_fallthru
      _
    %305 = vsyncpa [#allocation3], 1

</llo_original>
